<compile_context>
chip_gen: v6e
topology: v6e:2x2x1
jax: 0.10.0
libtpu: 0.0.40
codegen_flags: <defaults>
</compile_context>

<pallas_src>
import functools

import jax
import jax.numpy as jnp
from jax.experimental import pallas as pl
from jax.experimental.pallas import tpu as pltpu


def _make_ce2d_kernel(hw, t_hw):
    def kernel(logits_ref, target_ref, sum_ref, cnt_ref, sum_acc, cnt_acc):
        j = pl.program_id(1)

        # Zero the per-batch-element accumulators at the first spatial tile.
        @pl.when(j == 0)
        def _():
            sum_acc[...] = jnp.zeros_like(sum_acc)
            cnt_acc[...] = jnp.zeros_like(cnt_acc)

        x = logits_ref[...].astype(jnp.float32)   # (C, T)  class on sublanes
        t = target_ref[...]                       # (1, T)  int32

        # Validity mask: in-bounds spatial position AND (target >= 0) AND (target != 255).
        lane = jax.lax.broadcasted_iota(jnp.int32, t.shape, 1)        # (1, T)
        in_bounds = (j * t_hw + lane) < hw
        valid = jnp.logical_and(in_bounds,
                                jnp.logical_and(t >= 0, t != 255))    # (1, T)

        # Numerically stable log-sum-exp over the class (sublane) axis.
        m = jnp.max(x, axis=0, keepdims=True)                         # (1, T)
        lse = jnp.log(jnp.sum(jnp.exp(x - m), axis=0, keepdims=True)) + m

        # Gather the logit at the target class via one-hot select.
        # TODO(synk): targets in [C, 255) would make PyTorch's CrossEntropyLoss
        # error; here they contribute `lse` (one-hot misses).  Only <0 and 255
        # are excluded, matching the module's explicit mask.
        class_ids = jax.lax.broadcasted_iota(jnp.int32, x.shape, 0)   # (C, T)
        logit_t = jnp.sum(jnp.where(class_ids == t, x, 0.0),
                          axis=0, keepdims=True)                      # (1, T)

        per_pixel = jnp.where(valid, lse - logit_t, 0.0)              # (1, T)

        # Lane-dense element-wise accumulation (pure VPU adds, no per-step reduce).
        sum_acc[...] += per_pixel
        cnt_acc[...] += valid.astype(jnp.float32)

        # Collapse once per batch element at the last spatial tile.
        @pl.when(j == pl.num_programs(1) - 1)
        def _():
            s = jnp.sum(sum_acc[...])
            c = jnp.sum(cnt_acc[...])
            sum_ref[...] = jnp.full(sum_ref.shape, s, jnp.float32)
            cnt_ref[...] = jnp.full(cnt_ref.shape, c, jnp.float32)

    return kernel


def _pick_spatial_tile(hw, c, max_tile_bytes):
    """Lane-dense spatial tile: multiple of 128 (or the full extent) sized for VMEM."""
    # Budget for one logits tile (f32), assuming double-buffering by the pipeline.
    max_elems = max(128, (max_tile_bytes // (4 * max(c, 1))) // 128 * 128)
    if hw % 128 == 0:
        return min(hw, max_elems)
    t = min((hw // 128) * 128, max_elems)
    if t == 0:
        # hw < 128: single full-extent block (allowed: equals the array dim).
        return hw
    return t


def cross_entropy_2d(predict, target, *, max_tile_bytes=2 * 1024 * 1024):
    """predict: (N, C, H, W) float; target: (N, H, W) int. Returns scalar mean loss."""
    n, c, h, w = predict.shape
    assert target.shape == (n, h, w)
    hw = h * w

    # Free views -- no transpose, no padding, no extra HBM traffic.
    logits = predict.reshape(n, c, hw)
    tgt = target.astype(jnp.int32).reshape(n, 1, hw)

    t_hw = _pick_spatial_tile(hw, c, max_tile_bytes)
    n_j = pl.cdiv(hw, t_hw)

    kernel = _make_ce2d_kernel(hw, t_hw)

    out_sum, out_cnt = pl.pallas_call(
        kernel,
        out_shape=(jax.ShapeDtypeStruct((n, 1, 128), jnp.float32),
                   jax.ShapeDtypeStruct((n, 1, 128), jnp.float32)),
        grid_spec=pltpu.PrefetchScalarGridSpec(
            num_scalar_prefetch=0,
            grid=(n, n_j),
            in_specs=[
                pl.BlockSpec((None, c, t_hw), lambda i, j: (i, 0, j)),
                pl.BlockSpec((None, 1, t_hw), lambda i, j: (i, 0, j)),
            ],
            out_specs=(
                pl.BlockSpec((None, 1, 128), lambda i, j: (i, 0, 0)),
                pl.BlockSpec((None, 1, 128), lambda i, j: (i, 0, 0)),
            ),
            scratch_shapes=[
                pltpu.VMEM((1, t_hw), jnp.float32),   # per-lane loss accumulator
                pltpu.VMEM((1, t_hw), jnp.float32),   # per-lane valid-count accumulator
            ],
        ),
        compiler_params=pltpu.CompilerParams(
            dimension_semantics=("parallel", "arbitrary")),
    )(logits, tgt)

    total = jnp.sum(out_sum[:, 0, 0])
    count = jnp.sum(out_cnt[:, 0, 0])
    # TODO(synk): PyTorch's empty-valid-pixel branch returns a (1,)-shaped zeros
    # tensor; we return a scalar 0.0 instead.
    return jnp.where(count > 0.0, total / jnp.maximum(count, 1.0), 0.0)


def _reference(predict, target):
    """Pure-JAX reference of the PyTorch forward (mean CE over valid pixels)."""
    n, c, h, w = predict.shape
    logits = jnp.transpose(predict, (0, 2, 3, 1)).reshape(-1, c).astype(jnp.float32)
    tgt = target.astype(jnp.int32).reshape(-1)
    valid = jnp.logical_and(tgt >= 0, tgt != 255)
    logp = jax.nn.log_softmax(logits, axis=-1)
    nll = -jnp.take_along_axis(logp, jnp.clip(tgt, 0, c - 1)[:, None], axis=-1)[:, 0]
    nll = jnp.where(valid, nll, 0.0)
    cnt = jnp.sum(valid.astype(jnp.float32))
    return jnp.where(cnt > 0.0, jnp.sum(nll) / jnp.maximum(cnt, 1.0), 0.0)


if __name__ == "__main__":
    key = jax.random.PRNGKey(0)

    # Case 1: spatial extent is a multiple of 128 (no tail), with ignored pixels.
    k1, k2, k3, key = jax.random.split(key, 4)
    N, C, H, W = 2, 4, 16, 16
    predict = jax.random.normal(k1, (N, C, H, W), dtype=jnp.float32)
    target = jax.random.randint(k2, (N, H, W), 0, C, dtype=jnp.int32)
    ignore = jax.random.bernoulli(k3, 0.1, (N, H, W))
    target = jnp.where(ignore, 255, target)

    loss = jax.block_until_ready(cross_entropy_2d(predict, target))
    ref = _reference(predict, target)
    assert jnp.allclose(loss, ref, atol=1e-5, rtol=1e-5), (loss, ref)

    # Case 2: spatial extent smaller than 128 (single full-extent block).
    k1, k2, key = jax.random.split(key, 3)
    N2, C2, H2, W2 = 1, 3, 10, 10
    predict2 = jax.random.normal(k1, (N2, C2, H2, W2), dtype=jnp.float32)
    target2 = jax.random.randint(k2, (N2, H2, W2), 0, C2, dtype=jnp.int32)

    loss2 = jax.block_until_ready(cross_entropy_2d(predict2, target2))
    ref2 = _reference(predict2, target2)
    assert jnp.allclose(loss2, ref2, atol=1e-5, rtol=1e-5), (loss2, ref2)

    print("KERNEL_OK")
</pallas_src>

<mosaic_0001>
module attributes {stable_mosaic.version = 11 : i64} {
  func.func @kernel(%arg0: i32, %arg1: i32, %arg2: memref<1x4x256xf32, #tpu.memory_space<vmem>>, %arg3: memref<1x1x256xi32, #tpu.memory_space<vmem>>, %arg4: memref<1x1x128xf32, #tpu.memory_space<vmem>>, %arg5: memref<1x1x128xf32, #tpu.memory_space<vmem>>, %arg6: memref<1x256xf32, #tpu.memory_space<vmem>>, %arg7: memref<1x256xf32, #tpu.memory_space<vmem>>) attributes {dimension_semantics = [#tpu.dimension_semantics<parallel>, #tpu.dimension_semantics<arbitrary>], iteration_bounds = array<i64: 2, 1>, scalar_prefetch = 0 : i64, scratch_operands = 2 : i64, tpu.core_type = #tpu.core_type<tc>, window_params = [{transform_indices = @transform_0, window_bounds = array<i64: 1, 4, 256>}, {transform_indices = @transform_1, window_bounds = array<i64: 1, 1, 256>}, {transform_indices = @transform_2, window_bounds = array<i64: 1, 1, 128>}, {transform_indices = @transform_3, window_bounds = array<i64: 1, 1, 128>}]} {
    %c0_i32 = arith.constant 0 : i32
    %0 = arith.cmpi eq, %arg1, %c0_i32 : i32
    %1 = arith.extui %0 : i1 to i32
    %c0_i32_0 = arith.constant 0 : i32
    %2 = arith.cmpi ne, %1, %c0_i32_0 : i32
    scf.if %2 {
      %cst_22 = arith.constant 0.000000e+00 : f32
      %49 = vector.broadcast %cst_22 : f32 to vector<1x256xf32>
      %c0_23 = arith.constant 0 : index
      %c0_24 = arith.constant 0 : index
      %50 = vector.load %arg6[%c0_23, %c0_24] : memref<1x256xf32, #tpu.memory_space<vmem>>, vector<1x256xf32>
      tpu.vector_store %arg6[%c0_23, %c0_24], %49 {strides = array<i32>} : memref<1x256xf32, #tpu.memory_space<vmem>>, vector<1x256xf32>,
      %cst_25 = arith.constant 0.000000e+00 : f32
      %51 = vector.broadcast %cst_25 : f32 to vector<1x256xf32>
      %c0_26 = arith.constant 0 : index
      %c0_27 = arith.constant 0 : index
      %52 = vector.load %arg7[%c0_26, %c0_27] : memref<1x256xf32, #tpu.memory_space<vmem>>, vector<1x256xf32>
      tpu.vector_store %arg7[%c0_26, %c0_27], %51 {strides = array<i32>} : memref<1x256xf32, #tpu.memory_space<vmem>>, vector<1x256xf32>,
    } else {
    }
    %c0 = arith.constant 0 : index
    %c0_1 = arith.constant 0 : index
    %c0_2 = arith.constant 0 : index
    %3 = vector.load %arg2[%c0, %c0_1, %c0_2] : memref<1x4x256xf32, #tpu.memory_space<vmem>>, vector<1x4x256xf32>
    %4 = vector.shape_cast %3 : vector<1x4x256xf32> to vector<4x256xf32>
    %c0_3 = arith.constant 0 : index
    %c0_4 = arith.constant 0 : index
    %c0_5 = arith.constant 0 : index
    %5 = vector.load %arg3[%c0_3, %c0_4, %c0_5] : memref<1x1x256xi32, #tpu.memory_space<vmem>>, vector<1x1x256xi32>
    %6 = vector.shape_cast %5 : vector<1x1x256xi32> to vector<1x256xi32>
    %7 = tpu.iota {dimensions = array<i32: 1>} : vector<1x256xi32>
    %c256_i32 = arith.constant 256 : i32
    %8 = arith.muli %arg1, %c256_i32 : i32
    %9 = vector.broadcast %8 : i32 to vector<1x256xi32>
    %10 = arith.addi %9, %7 : vector<1x256xi32>
    %c256_i32_6 = arith.constant 256 : i32
    %11 = vector.broadcast %c256_i32_6 : i32 to vector<1x256xi32>
    %12 = arith.cmpi slt, %10, %11 : vector<1x256xi32>
    %c0_i32_7 = arith.constant 0 : i32
    %13 = vector.broadcast %c0_i32_7 : i32 to vector<1x256xi32>
    %14 = arith.cmpi sge, %6, %13 : vector<1x256xi32>
    %c255_i32 = arith.constant 255 : i32
    %15 = vector.broadcast %c255_i32 : i32 to vector<1x256xi32>
    %16 = arith.cmpi ne, %6, %15 : vector<1x256xi32>
    %17 = arith.andi %14, %16 : vector<1x256xi1>
    %18 = arith.andi %12, %17 : vector<1x256xi1>
    %cst = arith.constant dense<0xFF800000> : vector<256xf32>
    %19 = vector.multi_reduction <maximumf>, %4, %cst [0] : vector<4x256xf32> to vector<256xf32>
    %20 = vector.shape_cast %19 : vector<256xf32> to vector<1x256xf32>
    %21 = vector.broadcast %20 : vector<1x256xf32> to vector<4x256xf32>
    %22 = arith.subf %4, %21 : vector<4x256xf32>
    %23 = math.exp %22 : vector<4x256xf32>
    %cst_8 = arith.constant dense<0.000000e+00> : vector<256xf32>
    %24 = vector.multi_reduction <add>, %23, %cst_8 [0] : vector<4x256xf32> to vector<256xf32>
    %25 = vector.shape_cast %24 : vector<256xf32> to vector<1x256xf32>
    %26 = math.log %25 : vector<1x256xf32>
    %27 = arith.addf %26, %20 : vector<1x256xf32>
    %28 = tpu.iota {dimensions = array<i32: 0>} : vector<4x256xi32>
    %29 = vector.broadcast %6 : vector<1x256xi32> to vector<4x256xi32>
    %30 = arith.cmpi eq, %28, %29 : vector<4x256xi32>
    %cst_9 = arith.constant 0.000000e+00 : f32
    %31 = vector.broadcast %cst_9 : f32 to vector<4x256xf32>
    %32 = arith.select %30, %4, %31 : vector<4x256xi1>, vector<4x256xf32>
    %cst_10 = arith.constant dense<0.000000e+00> : vector<256xf32>
    %33 = vector.multi_reduction <add>, %32, %cst_10 [0] : vector<4x256xf32> to vector<256xf32>
    %34 = vector.shape_cast %33 : vector<256xf32> to vector<1x256xf32>
    %35 = arith.subf %27, %34 : vector<1x256xf32>
    %cst_11 = arith.constant 0.000000e+00 : f32
    %36 = vector.broadcast %cst_11 : f32 to vector<1x256xf32>
    %37 = arith.select %18, %35, %36 : vector<1x256xi1>, vector<1x256xf32>
    %c0_12 = arith.constant 0 : index
    %c0_13 = arith.constant 0 : index
    %38 = vector.load %arg6[%c0_12, %c0_13] : memref<1x256xf32, #tpu.memory_space<vmem>>, vector<1x256xf32>
    %39 = arith.addf %38, %37 : vector<1x256xf32>
    %c0_14 = arith.constant 0 : index
    %c0_15 = arith.constant 0 : index
    %40 = vector.load %arg6[%c0_14, %c0_15] : memref<1x256xf32, #tpu.memory_space<vmem>>, vector<1x256xf32>
    tpu.vector_store %arg6[%c0_14, %c0_15], %39 {strides = array<i32>} : memref<1x256xf32, #tpu.memory_space<vmem>>, vector<1x256xf32>,
    %c0_16 = arith.constant 0 : index
    %c0_17 = arith.constant 0 : index
    %41 = vector.load %arg7[%c0_16, %c0_17] : memref<1x256xf32, #tpu.memory_space<vmem>>, vector<1x256xf32>
    %42 = arith.extui %18 : vector<1x256xi1> to vector<1x256xi32>
    %43 = arith.sitofp %42 : vector<1x256xi32> to vector<1x256xf32>
    %44 = arith.addf %41, %43 : vector<1x256xf32>
    %c0_18 = arith.constant 0 : index
    %c0_19 = arith.constant 0 : index
    %45 = vector.load %arg7[%c0_18, %c0_19] : memref<1x256xf32, #tpu.memory_space<vmem>>, vector<1x256xf32>
    tpu.vector_store %arg7[%c0_18, %c0_19], %44 {strides = array<i32>} : memref<1x256xf32, #tpu.memory_space<vmem>>, vector<1x256xf32>,
    %c0_i32_20 = arith.constant 0 : i32
    %46 = arith.cmpi eq, %arg1, %c0_i32_20 : i32
    %47 = arith.extui %46 : i1 to i32
    %c0_i32_21 = arith.constant 0 : i32
    %48 = arith.cmpi ne, %47, %c0_i32_21 : i32
    scf.if %48 {
      %c0_22 = arith.constant 0 : index
      %c0_23 = arith.constant 0 : index
      %49 = vector.load %arg6[%c0_22, %c0_23] : memref<1x256xf32, #tpu.memory_space<vmem>>, vector<1x256xf32>
      %50 = vector.shape_cast %49 : vector<1x256xf32> to vector<1x1x256xf32>
      %cst_24 = arith.constant dense<0.000000e+00> : vector<1xf32>
      %51 = vector.multi_reduction <add>, %50, %cst_24 [1, 2] : vector<1x1x256xf32> to vector<1xf32>
      %52 = vector.shape_cast %51 : vector<1xf32> to vector<1x1x1xf32>
      %53 = vector.extract %52[0, 0, 0] : f32 from vector<1x1x1xf32>
      %c0_25 = arith.constant 0 : index
      %c0_26 = arith.constant 0 : index
      %54 = vector.load %arg7[%c0_25, %c0_26] : memref<1x256xf32, #tpu.memory_space<vmem>>, vector<1x256xf32>
      %55 = vector.shape_cast %54 : vector<1x256xf32> to vector<1x1x256xf32>
      %cst_27 = arith.constant dense<0.000000e+00> : vector<1xf32>
      %56 = vector.multi_reduction <add>, %55, %cst_27 [1, 2] : vector<1x1x256xf32> to vector<1xf32>
      %57 = vector.shape_cast %56 : vector<1xf32> to vector<1x1x1xf32>
      %58 = vector.extract %57[0, 0, 0] : f32 from vector<1x1x1xf32>
      %59 = vector.broadcast %53 : f32 to vector<1x128xf32>
      %c0_28 = arith.constant 0 : index
      %c0_29 = arith.constant 0 : index
      %c0_30 = arith.constant 0 : index
      %60 = vector.load %arg4[%c0_28, %c0_29, %c0_30] : memref<1x1x128xf32, #tpu.memory_space<vmem>>, vector<1x1x128xf32>
      %61 = vector.shape_cast %60 : vector<1x1x128xf32> to vector<1x128xf32>
      %62 = vector.shape_cast %59 : vector<1x128xf32> to vector<1x1x128xf32>
      tpu.vector_store %arg4[%c0_28, %c0_29, %c0_30], %62 {strides = array<i32>} : memref<1x1x128xf32, #tpu.memory_space<vmem>>, vector<1x1x128xf32>,
      %63 = vector.broadcast %58 : f32 to vector<1x128xf32>
      %c0_31 = arith.constant 0 : index
      %c0_32 = arith.constant 0 : index
      %c0_33 = arith.constant 0 : index
      %64 = vector.load %arg5[%c0_31, %c0_32, %c0_33] : memref<1x1x128xf32, #tpu.memory_space<vmem>>, vector<1x1x128xf32>
      %65 = vector.shape_cast %64 : vector<1x1x128xf32> to vector<1x128xf32>
      %66 = vector.shape_cast %63 : vector<1x128xf32> to vector<1x1x128xf32>
      tpu.vector_store %arg5[%c0_31, %c0_32, %c0_33], %66 {strides = array<i32>} : memref<1x1x128xf32, #tpu.memory_space<vmem>>, vector<1x1x128xf32>,
    } else {
    }
    return
  }
  func.func @transform_0(%arg0: i32, %arg1: i32) -> (i32, i32, i32) {
    %c0_i32 = arith.constant 0 : i32
    %c0_i32_0 = arith.constant 0 : i32
    return %arg0, %c0_i32, %arg1 : i32, i32, i32
  }
  func.func @transform_1(%arg0: i32, %arg1: i32) -> (i32, i32, i32) {
    %c0_i32 = arith.constant 0 : i32
    %c0_i32_0 = arith.constant 0 : i32
    return %arg0, %c0_i32, %arg1 : i32, i32, i32
  }
  func.func @transform_2(%arg0: i32, %arg1: i32) -> (i32, i32, i32) {
    %c0_i32 = arith.constant 0 : i32
    %c0_i32_0 = arith.constant 0 : i32
    %c0_i32_1 = arith.constant 0 : i32
    return %arg0, %c0_i32, %c0_i32_0 : i32, i32, i32
  }
  func.func @transform_3(%arg0: i32, %arg1: i32) -> (i32, i32, i32) {
    %c0_i32 = arith.constant 0 : i32
    %c0_i32_0 = arith.constant 0 : i32
    %c0_i32_1 = arith.constant 0 : i32
    return %arg0, %c0_i32, %c0_i32_0 : i32, i32, i32
  }
}

</mosaic_0001>

<llo_original>
// kernel: tpu_custom_call.1
$region0: #{tpu_custom_call.1}
  #allocation0 [shape = 'u32[]', space=smem, size = 0x4, offset = 0x4, fixed_abs, tag = 'smem constant byte address 0x4 - core index']
  #allocation1 [shape = 'u32[144,128]{1,0:T(1,128)}', space=vmem, size = 0x12000, scoped, tag = 'internal scratch']
  #allocation2 [shape = 'f32[1,256]{1,0:T(1,128)}', space=vmem, size = 0x400, scoped, tag = 'scratch operand']
  #allocation3 [shape = 'f32[1,256]{1,0:T(1,128)}', space=vmem, size = 0x400, scoped, tag = 'scratch operand']
  %s0 = inlined_call_operand.hbm [shape: f32[2,4,256], index: 0, kind: input, shape index: {}]
  %s1 = inlined_call_operand.hbm [shape: s32[2,1,256], index: 1, kind: input, shape index: {}]
  %s2 = inlined_call_operand.hbm [shape: f32[2,1,128], index: 2, kind: output, shape index: {0}]
  %s3 = inlined_call_operand.hbm [shape: f32[2,1,128], index: 3, kind: output, shape index: {1}]
  %4 = xla_tuple %s2, %s3
  %s5 = sld [smem:[#allocation0]]
  $region65: #{tpu_custom_call.1} parent=0
    _
  %s7 = ssub.s32 1, %s5
  %s8 = scalar_select 0, %s7, %s5
  $region1: #{tpu_custom_call.1} parent=0
    #allocation4 [shape = 'u8[8192]{0}', space=vmem, size = 0x2000, scoped, tag = 'input window, operand 0']
    #allocation5 [shape = 's32[2]{0}', space=sflag, size = 0x8, scoped, tag = 'scoped memory for tpu_custom_call.1']
    #allocation6 [shape = 's32[2]{0}', space=sflag, size = 0x8, scoped, tag = 'scoped memory for tpu_custom_call.1']
    #allocation7 [shape = 'u8[2048]{0}', space=vmem, size = 0x800, scoped, tag = 'input window, operand 1']
    #allocation8 [shape = 's32[2]{0}', space=sflag, size = 0x8, scoped, tag = 'scoped memory for tpu_custom_call.1']
    #allocation9 [shape = 'u8[1024]{0}', space=vmem, size = 0x400, scoped, tag = 'output window, operand 0']
    #allocation10 [shape = 'u8[1024]{0}', space=vmem, size = 0x400, scoped, tag = 'output window, operand 1']
    #allocation11 [shape = 's32[2]{0}', space=sflag, size = 0x8, scoped, tag = 'scoped memory for tpu_custom_call.1']
    %9 = vsyncpa [#allocation5], 0
    %s10 = scalar_lea.sflag [#allocation5], 1
    %11 = vsyncpa %s10, 0
    %12 = vsyncpa [#allocation8], 0
    %s13 = scalar_lea.sflag [#allocation8], 1
    %14 = vsyncpa %s13, 0
    %15 = vsyncpa [#allocation6], 0
    %s16 = scalar_lea.sflag [#allocation6], 1
    %17 = vsyncpa %s16, 0
    %18 = vsyncpa [#allocation11], 0
    %s19 = scalar_lea.sflag [#allocation11], 1
    %20 = vsyncpa %s19, 0
    loop: start=0, step=1, limit=4
    $region2: #{tpu_custom_call.1} parent=1 // loop_pre_header
      _
    $region3: #{tpu_custom_call.1} parent=1 // loop_header
      %s22 = sphi 0, %s26
      %p23 = scmp.ge.s32.totalorder %s22, 4
      %s29 = sphi 0, %s41
      %s30 = sphi 0, %s37
      %s31 = sphi 0, %s29
      %s32 = sphi 0, %s30
      %s33 = sphi 0, %s31
      %s34 = sphi 0, %s32
      %s46 = sphi 0, %s48
      %s49 = sphi 0, %s46
      %s50 = sphi 0, %s49
      %s66 = sphi 0, %s50
      %s74 = sphi 0, %s76
      %s77 = sphi 0, %s74
      %s78 = sphi 0, %s77
      %s94 = sphi 0, %s78
      %s100 = sphi 0, %s102
      %s103 = sphi 0, %s100
      %s104 = sphi 0, %s103
      %s120 = sphi 0, %s104
      %s126 = sphi 0, %s128
      %s129 = sphi 0, %s126
      %s130 = sphi 0, %s129
      %s146 = sphi 0, %s130
    $region4: #{tpu_custom_call.1} parent=1 // loop_header_branch
      %25 = sbr.rel (%p23) target = $region8
    $region5: #{tpu_custom_call.1} parent=1 // loop_body
      %s27 = ssub.s32 %s22, 1
      %s28 = ssub.s32 %s22, 2
      %s35 = sadd.s32 1, %s30
      %p36 = scmp.ge.s32.totalorder %s35, 1
      %s37 = scalar_select %p36, 0, %s35
      %s38 = sadd.s32 1, %s29
      %s39 = scalar_select %p36, %s38, %s29
      %p40 = scmp.ge.s32.totalorder %s39, 2
      %s41 = scalar_select %p40, 0, %s39
      %s42 = ssub.s32 %s29, %s41
      %s43 = ssub.s32 %s30, %s37
      %s44 = sor.u32 %s42, %s43
      %p45 = scmp.eq.s32.totalorder %s44, 0
      %s47 = sadd.s32 %s46, 1
      %s48 = scalar_select %p45, %s46, %s47
      %p51 = pneg %p45
      %p52 = scmp.eq.s32.totalorder %s22, 1
      %p53 = por %p51, %p52
      %p54 = scmp.ne.s32.totalorder %s46, %s49
      %p55 = scmp.eq.s32.totalorder %s22, 0
      %p56 = por %p54, %p55
      %p57 = scmp.ne.s32.totalorder %s46, %s49
      %p58 = scmp.eq.s32.totalorder %s27, 1
      %p59 = por %p57, %p58
      %p60 = scmp.ne.s32.totalorder %s49, %s50
      %p61 = scmp.eq.s32.totalorder %s27, 0
      %p62 = por %p60, %p61
      %p63 = scmp.ne.s32.totalorder %s49, %s50
      %p64 = scmp.eq.s32.totalorder %s28, 1
      %p65 = por %p63, %p64
      %p67 = scmp.ne.s32.totalorder %s50, %s66
      %p68 = scmp.eq.s32.totalorder %s28, 0
      %p69 = por %p67, %p68
      %s70 = ssub.s32 %s29, %s41
      %s71 = ssub.s32 %s30, %s37
      %s72 = sor.u32 %s70, %s71
      %p73 = scmp.eq.s32.totalorder %s72, 0
      %s75 = sadd.s32 %s74, 1
      %s76 = scalar_select %p73, %s74, %s75
      %p79 = pneg %p73
      %p80 = scmp.eq.s32.totalorder %s22, 1
      %p81 = por %p79, %p80
      %p82 = scmp.ne.s32.totalorder %s74, %s77
      %p83 = scmp.eq.s32.totalorder %s22, 0
      %p84 = por %p82, %p83
      %p85 = scmp.ne.s32.totalorder %s74, %s77
      %p86 = scmp.eq.s32.totalorder %s27, 1
      %p87 = por %p85, %p86
      %p88 = scmp.ne.s32.totalorder %s77, %s78
      %p89 = scmp.eq.s32.totalorder %s27, 0
      %p90 = por %p88, %p89
      %p91 = scmp.ne.s32.totalorder %s77, %s78
      %p92 = scmp.eq.s32.totalorder %s28, 1
      %p93 = por %p91, %p92
      %p95 = scmp.ne.s32.totalorder %s78, %s94
      %p96 = scmp.eq.s32.totalorder %s28, 0
      %p97 = por %p95, %p96
      %s98 = ssub.s32 %s29, %s41
      %p99 = scmp.eq.s32.totalorder %s98, 0
      %s101 = sadd.s32 %s100, 1
      %s102 = scalar_select %p99, %s100, %s101
      %p105 = pneg %p99
      %p106 = scmp.eq.s32.totalorder %s22, 1
      %p107 = por %p105, %p106
      %p108 = scmp.ne.s32.totalorder %s100, %s103
      %p109 = scmp.eq.s32.totalorder %s22, 0
      %p110 = por %p108, %p109
      %p111 = scmp.ne.s32.totalorder %s100, %s103
      %p112 = scmp.eq.s32.totalorder %s27, 1
      %p113 = por %p111, %p112
      %p114 = scmp.ne.s32.totalorder %s103, %s104
      %p115 = scmp.eq.s32.totalorder %s27, 0
      %p116 = por %p114, %p115
      %p117 = scmp.ne.s32.totalorder %s103, %s104
      %p118 = scmp.eq.s32.totalorder %s28, 1
      %p119 = por %p117, %p118
      %p121 = scmp.ne.s32.totalorder %s104, %s120
      %p122 = scmp.eq.s32.totalorder %s28, 0
      %p123 = por %p121, %p122
      %s124 = ssub.s32 %s29, %s41
      %p125 = scmp.eq.s32.totalorder %s124, 0
      %s127 = sadd.s32 %s126, 1
      %s128 = scalar_select %p125, %s126, %s127
      %p131 = pneg %p125
      %p132 = scmp.eq.s32.totalorder %s22, 1
      %p133 = por %p131, %p132
      %p134 = scmp.ne.s32.totalorder %s126, %s129
      %p135 = scmp.eq.s32.totalorder %s22, 0
      %p136 = por %p134, %p135
      %p137 = scmp.ne.s32.totalorder %s126, %s129
      %p138 = scmp.eq.s32.totalorder %s27, 1
      %p139 = por %p137, %p138
      %p140 = scmp.ne.s32.totalorder %s129, %s130
      %p141 = scmp.eq.s32.totalorder %s27, 0
      %p142 = por %p140, %p141
      %p143 = scmp.ne.s32.totalorder %s129, %s130
      %p144 = scmp.eq.s32.totalorder %s28, 1
      %p145 = por %p143, %p144
      %p147 = scmp.ne.s32.totalorder %s130, %s146
      %p148 = scmp.eq.s32.totalorder %s28, 0
      %p149 = por %p147, %p148
      %p150 = scmp.le.s32.totalorder 1, %s22
      %p151 = scmp.lt.s32.totalorder %s22, 3
      %p152 = pnand %p150, %p151
      %p153 = pneg %p152
      // Predicated region
      $region9: #{tpu_custom_call.1} parent=5 // pred_check
        _
      $region10: #{tpu_custom_call.1} parent=5 // pred_check_branch
        %155 = sbr.rel (%p152) target = $region12
      $region11: #{tpu_custom_call.1} parent=5 // pred_region
        %s156 = ssub.s32 %s22, 1
      $region12: #{tpu_custom_call.1} parent=5 // pred_fallthru
        _
      %p157 = scmp.lt.s32.totalorder %s22, 2
      // Predicated region
      $region13: #{tpu_custom_call.1} parent=5 // pred_check
        %p158 = pneg %p157
      $region14: #{tpu_custom_call.1} parent=5 // pred_check_branch
        %160 = sbr.rel (%p158) target = $region16
      $region15: #{tpu_custom_call.1} parent=5 // pred_region
        // Predicated region
        $region17: #{tpu_custom_call.1} parent=15 // pred_check
          %p161 = pneg %p56
        $region18: #{tpu_custom_call.1} parent=15 // pred_check_branch
          %163 = sbr.rel (%p161) target = $region20
        $region19: #{tpu_custom_call.1} parent=15 // pred_region
          %s164 = sand.u32 %s46, 1
          %s165 = scalar_lea.sflag [#allocation5], %s164
          %s166 = sand.u32 %s46, 1
          %s167 = smul.addr %s166, 8
          %s168 = scalar_lea.vmem [#allocation4], %s167
          %s169 = smul.u32 2, %s30
          %s171 = ssub.s32 128, 128
          %172 = vsyncadd %s165, %s171
          %s173 = smul.addr %s29, 2
          %s174 = sadd.s32 %s169, %s173
          %s175 = smul.addr %s174, 64
          %s176 = scalar_lea.hbm %s0, %s175
          %s178 = sshll.u32 %s168, 4
          %s179 = int_to_ptr.vmem [resolvable:$true] %s178
          %181 = dma.hbm_to_vmem [thread:$0]  %s176, 128, %s179, %s165
        $region20: #{tpu_custom_call.1} parent=15 // pred_fallthru
          _
        // Predicated region
        $region21: #{tpu_custom_call.1} parent=15 // pred_check
          %p182 = pneg %p84
        $region22: #{tpu_custom_call.1} parent=15 // pred_check_branch
          %184 = sbr.rel (%p182) target = $region24
        $region23: #{tpu_custom_call.1} parent=15 // pred_region
          %s185 = sand.u32 %s74, 1
          %s186 = scalar_lea.sflag [#allocation8], %s185
          %s187 = sand.u32 %s74, 1
          %s188 = smul.addr %s187, 2
          %s189 = scalar_lea.vmem [#allocation7], %s188
          %s190 = smul.u32 2, %s30
          %s192 = ssub.s32 32, 32
          %193 = vsyncadd %s186, %s192
          %s194 = smul.addr %s29, 2
          %s195 = sadd.s32 %s190, %s194
          %s196 = smul.addr %s195, 16
          %s197 = scalar_lea.hbm %s1, %s196
          %s199 = sshll.u32 %s189, 4
          %s200 = int_to_ptr.vmem [resolvable:$true] %s199
          %202 = dma.hbm_to_vmem [thread:$0]  %s197, 32, %s200, %s186
        $region24: #{tpu_custom_call.1} parent=15 // pred_fallthru
          _
      $region16: #{tpu_custom_call.1} parent=5 // pred_fallthru
        _
      %p203 = scmp.le.s32.totalorder 1, %s22
      %p204 = scmp.lt.s32.totalorder %s22, 3
      %p205 = pnand %p203, %p204
      %p206 = pneg %p205
      // Predicated region
      $region25: #{tpu_custom_call.1} parent=5 // pred_check
        _
      $region26: #{tpu_custom_call.1} parent=5 // pred_check_branch
        %208 = sbr.rel (%p205) target = $region28
      $region27: #{tpu_custom_call.1} parent=5 // pred_region
        %s209 = ssub.s32 %s22, 1
        %s210 = sand.u32 %s49, 1
        %s211 = scalar_lea.sflag [#allocation5], %s210
        %s212 = sand.u32 %s49, 1
        %s213 = smul.addr %s212, 8
        %s214 = scalar_lea.vmem [#allocation4], %s213
        // Predicated region
        $region29: #{tpu_custom_call.1} parent=27 // pred_check
          %p215 = pneg %p62
        $region30: #{tpu_custom_call.1} parent=27 // pred_check_branch
          %217 = sbr.rel (%p215) target = $region32
        $region31: #{tpu_custom_call.1} parent=27 // pred_region
          %218 = dma.done %s211, 128
        $region32: #{tpu_custom_call.1} parent=27 // pred_fallthru
          _
        %s219 = sand.u32 %s77, 1
        %s220 = scalar_lea.sflag [#allocation8], %s219
        %s221 = sand.u32 %s77, 1
        %s222 = smul.addr %s221, 2
        %s223 = scalar_lea.vmem [#allocation7], %s222
        // Predicated region
        $region33: #{tpu_custom_call.1} parent=27 // pred_check
          %p224 = pneg %p90
        $region34: #{tpu_custom_call.1} parent=27 // pred_check_branch
          %226 = sbr.rel (%p224) target = $region36
        $region35: #{tpu_custom_call.1} parent=27 // pred_region
          %227 = dma.done %s220, 32
        $region36: #{tpu_custom_call.1} parent=27 // pred_fallthru
          _
        %s228 = sand.u32 %s49, 1
        %s229 = scalar_lea.sflag [#allocation5], %s228
        %s230 = sand.u32 %s49, 1
        %s231 = smul.addr %s230, 8
        %s232 = scalar_lea.vmem [#allocation4], %s231
        %p233 = pneg %p62
        %p234 = pneg %p59
        %s235 = sand.u32 %s77, 1
        %s236 = scalar_lea.sflag [#allocation8], %s235
        %s237 = sand.u32 %s77, 1
        %s238 = smul.addr %s237, 2
        %s239 = scalar_lea.vmem [#allocation7], %s238
        %p240 = pneg %p90
        %p241 = pneg %p87
        %p242 = pneg %p116
        %p243 = pneg %p113
        %s244 = sand.u32 %s103, 1
        %s245 = scalar_lea.sflag [#allocation6], %s244
        %s246 = sand.u32 %s103, 1
        %s247 = scalar_lea.vmem [#allocation9], %s246
        %p248 = pneg %p142
        %p249 = pneg %p139
        %s250 = sand.u32 %s129, 1
        %s251 = scalar_lea.sflag [#allocation11], %s250
        %s252 = sand.u32 %s129, 1
        %s253 = scalar_lea.vmem [#allocation10], %s252
        %s254 = smul.u32 2, %s32
        %s255 = smul.u32 2, %s32
        %p256 = scmp.eq.s32.totalorder %s32, 0
        // Predicated region
        $region37: #{tpu_custom_call.1} parent=27 // pred_check
          %p257 = pneg %p256
        $region38: #{tpu_custom_call.1} parent=27 // pred_check_branch
          %259 = sbr.rel (%p257) target = $region40
        $region39: #{tpu_custom_call.1} parent=27 // pred_region
          %v260 = vlaneseq
          %vm261 = vcmp.ge.s32.totalorder %v260, 0
          %vm262 = vcmp.lt.s32.totalorder %v260, 256
          %vm263 = vmand %vm261, %vm262
          %264 = vst.msk [vmem:[#allocation2] sm:$0x3] %vm263, 0.0
          %265 = vst.msk [vmem:[#allocation3] sm:$0x3] %vm263, 0.0
        $region40: #{tpu_custom_call.1} parent=27 // pred_fallthru
          _
        %v266 = vld [vmem:[%s214] sm:$0xff]
        %v267 = vld [vmem:[%s223] sm:$0x3]
        %v268 = vlaneseq
        %v269 = vand.u32 %v268, 127
        %v270 = vadd.s32 %v269, 128
        %s271 = smul.u32 %s32, 256
        %v272 = vstv %s271
        %v273 = vadd.s32 %v272, %v269
        %v274 = vadd.s32 %v272, %v270
        %vm275 = vcmp.lt.s32.totalorder %v273, 256
        %vm276 = vcmp.lt.s32.totalorder %v274, 256
        %vm277 = vcmp.ge.s32.totalorder %v267, 0
        %vm278 = vcmp.ne.s32.totalorder %v267, 255
        %vm279 = vmand %vm277, %vm278
        %v280 = vsel %vm279, 1, 0
        %v281 = vlaneseq
        %v282 = vshrl.u32 %v281, 7
        %v283 = vsub.s32 0, %v282
        %v284 = vrot.slane %v280, %v283
        %v285 = vlaneseq
        %v286 = vshrl.u32 %v285, 7
        %v287 = vsub.s32 1, %v286
        %v288 = vrot.slane %v280, %v287
        %vm289 = vcmp.ne.s32.totalorder %v284, 0
        %vm290 = vcmp.ne.s32.totalorder %v288, 0
        %vm291 = vmand %vm275, %vm289
        %vm292 = vmand %vm276, %vm290
        %v294 = vcombine.high %v266, %v266
        %vm296 = vcmask 1043456
        %v297 = vsel %vm296, %v266, -inf
        %v298 = vrot.slane %v297, 4
        %v299 = vmax.f32 %v297, %v298
        %v300 = vrot.slane %v299, 2
        %v301 = vmax.f32 %v299, %v300
        %v302 = vrot.slane %v301, 1
        %v303 = vmax.f32 %v301, %v302
        %v304 = vsel %vm296, %v294, -inf
        %v305 = vrot.slane %v304, 4
        %v306 = vmax.f32 %v304, %v305
        %v307 = vrot.slane %v306, 2
        %v308 = vmax.f32 %v306, %v307
        %v309 = vrot.slane %v308, 1
        %v310 = vmax.f32 %v308, %v309
        %v313 = vcombine.low %v303, %v310
        %v315 = vsub.f32 %v266, %v313
        %v316 = vmul.f32 %v315, 1.442695
        %v317 = vpow.pop %v316
        %v319 = vcombine.high %v317, %v317
        %v321 = vsel %vm296, %v317, 0.0
        %v322 = vrot.slane %v321, 4
        %v323 = vadd.f32 %v321, %v322
        %v324 = vrot.slane %v323, 2
        %v325 = vadd.f32 %v323, %v324
        %v326 = vrot.slane %v325, 1
        %v327 = vadd.f32 %v325, %v326
        %v328 = vsel %vm296, %v319, 0.0
        %v329 = vrot.slane %v328, 4
        %v330 = vadd.f32 %v328, %v329
        %v331 = vrot.slane %v330, 2
        %v332 = vadd.f32 %v330, %v331
        %v333 = vrot.slane %v332, 1
        %v334 = vadd.f32 %v332, %v333
        %v335 = vlog2.pop %v327
        %v336 = vmul.f32 %v335, 0.6931472
        %v337 = vlog2.pop %v334
        %v338 = vmul.f32 %v337, 0.6931472
        %v339 = vadd.f32 %v336, %v303
        %v340 = vadd.f32 %v338, %v310
        %v341 = vlaneseq
        %v342 = vshrl.u32 %v341, 7
        %v343 = vlaneseq
        %v344 = vshrl.u32 %v343, 7
        %v345 = vsub.s32 0, %v344
        %v346 = vrot.slane %v267, %v345
        %v347 = vlaneseq
        %v348 = vshrl.u32 %v347, 7
        %v349 = vsub.s32 1, %v348
        %v350 = vrot.slane %v267, %v349
        %vm351 = vcmp.eq.s32.totalorder %v342, %v346
        %vm352 = vcmp.eq.s32.totalorder %v342, %v350
        %v353 = vsel %vm351, %v266, 0.0
        %v354 = vsel %vm352, %v294, 0.0
        %v355 = vsel %vm296, %v353, 0.0
        %v356 = vrot.slane %v355, 4
        %v357 = vadd.f32 %v355, %v356
        %v358 = vrot.slane %v357, 2
        %v359 = vadd.f32 %v357, %v358
        %v360 = vrot.slane %v359, 1
        %v361 = vadd.f32 %v359, %v360
        %v362 = vsel %vm296, %v354, 0.0
        %v363 = vrot.slane %v362, 4
        %v364 = vadd.f32 %v362, %v363
        %v365 = vrot.slane %v364, 2
        %v366 = vadd.f32 %v364, %v365
        %v367 = vrot.slane %v366, 1
        %v368 = vadd.f32 %v366, %v367
        %v369 = vsub.f32 %v339, %v361
        %v370 = vsub.f32 %v340, %v368
        %v371 = vsel %vm291, %v369, 0.0
        %v372 = vsel %vm292, %v370, 0.0
        %v373 = vld [vmem:[#allocation2] sm:$0x3]
        %v376 = vcombine.low %v371, %v372
        %v378 = vunpack.c.l.s4 1966171168
        %v379 = vunpack.c.0.s8 %v378
        %v380 = vlaneseq
        %v381 = vshrl.u32 %v380, 7
        %v382 = vsub.s32 %v379, %v381
        %v383 = vrot.slane %v376, %v382
        %v385 = vunpack.c.l.s4 1966171168
        %v386 = vunpack.c.0.s8 %v385
        %v387 = vlaneseq
        %v388 = vshrl.u32 %v387, 7
        %v389 = vsub.s32 %v386, %v388
        %v390 = vrot.slane %v383, %v389
        %v392 = vadd.f32 %v373, %v390
        %v393 = vlaneseq
        %vm394 = vcmp.ge.s32.totalorder %v393, 0
        %vm395 = vcmp.lt.s32.totalorder %v393, 256
        %vm396 = vmand %vm394, %vm395
        %397 = vst.msk [vmem:[#allocation2] sm:$0x3] %vm396, %v392
        %v398 = vld [vmem:[#allocation3] sm:$0x3]
        %v399 = vsel %vm291, 1, 0
        %v400 = vsel %vm292, 1, 0
        %v401 = vcvt.s32.f32 %v399
        %v402 = vcvt.s32.f32 %v400
        %v405 = vcombine.low %v401, %v402
        %v407 = vunpack.c.l.s4 1966171168
        %v408 = vunpack.c.0.s8 %v407
        %v409 = vlaneseq
        %v410 = vshrl.u32 %v409, 7
        %v411 = vsub.s32 %v408, %v410
        %v412 = vrot.slane %v405, %v411
        %v414 = vunpack.c.l.s4 1966171168
        %v415 = vunpack.c.0.s8 %v414
        %v416 = vlaneseq
        %v417 = vshrl.u32 %v416, 7
        %v418 = vsub.s32 %v415, %v417
        %v419 = vrot.slane %v412, %v418
        %v421 = vadd.f32 %v398, %v419
        %422 = vst.msk [vmem:[#allocation3] sm:$0x3] %vm396, %v421
        // Predicated region
        $region41: #{tpu_custom_call.1} parent=27 // pred_check
          %p423 = pneg %p256
        $region42: #{tpu_custom_call.1} parent=27 // pred_check_branch
          %425 = sbr.rel (%p423) target = $region44
        $region43: #{tpu_custom_call.1} parent=27 // pred_region
          %v426 = vld [vmem:[#allocation2] sm:$0x3]
          %v428 = vlaneseq
          %v429 = vshrl.u32 %v428, 7
          %v430 = vsub.s32 0, %v429
          %v431 = vrot.slane %v426, %v430
          %v432 = vlaneseq
          %v433 = vshrl.u32 %v432, 7
          %v434 = vsub.s32 1, %v433
          %v435 = vrot.slane %v426, %v434
          %vm438 = vcmask 1040384
          %v439 = vsel %vm438, %v431, 0.0
          %v440 = vsel %vm438, %v435, 0.0
          %v441 = vadd.f32 %v439, %v440
          %442 = vadd.xlane.f32.xlu0 %v441
          %v443 = vpop.xlane.xlu0 %442
          %v444 = vrot.slane %v443, 4
          %v445 = vadd.f32 %v443, %v444
          %v446 = vrot.slane %v445, 2
          %v447 = vadd.f32 %v445, %v446
          %v448 = vrot.slane %v447, 1
          %v449 = vadd.f32 %v447, %v448
          %s450 = vtos %v449
          %v451 = vld [vmem:[#allocation3] sm:$0x3]
          %v453 = vlaneseq
          %v454 = vshrl.u32 %v453, 7
          %v455 = vsub.s32 0, %v454
          %v456 = vrot.slane %v451, %v455
          %v457 = vlaneseq
          %v458 = vshrl.u32 %v457, 7
          %v459 = vsub.s32 1, %v458
          %v460 = vrot.slane %v451, %v459
          %v463 = vsel %vm438, %v456, 0.0
          %v464 = vsel %vm438, %v460, 0.0
          %v465 = vadd.f32 %v463, %v464
          %466 = vadd.xlane.f32.xlu0 %v465
          %v467 = vpop.xlane.xlu0 %466
          %v468 = vrot.slane %v467, 4
          %v469 = vadd.f32 %v467, %v468
          %v470 = vrot.slane %v469, 2
          %v471 = vadd.f32 %v469, %v470
          %v472 = vrot.slane %v471, 1
          %v473 = vadd.f32 %v471, %v472
          %s474 = vtos %v473
          %v475 = vstv %s450
          %476 = vst [vmem:[%s247] sm:$0x1] %v475
          %v477 = vstv %s474
          %478 = vst [vmem:[%s253] sm:$0x1] %v477
        $region44: #{tpu_custom_call.1} parent=27 // pred_fallthru
          _
        %s479 = sand.u32 %s103, 1
        %s480 = scalar_lea.sflag [#allocation6], %s479
        %s481 = sand.u32 %s103, 1
        %s482 = scalar_lea.vmem [#allocation9], %s481
        %s483 = sand.u32 %s129, 1
        %s484 = scalar_lea.sflag [#allocation11], %s483
        %s485 = sand.u32 %s129, 1
        %s486 = scalar_lea.vmem [#allocation10], %s485
        // Predicated region
        $region45: #{tpu_custom_call.1} parent=27 // pred_check
          %p487 = pneg %p113
        $region46: #{tpu_custom_call.1} parent=27 // pred_check_branch
          %489 = sbr.rel (%p487) target = $region48
        $region47: #{tpu_custom_call.1} parent=27 // pred_region
          %s491 = ssub.s32 16, 16
          %492 = vsyncadd %s480, %s491
          %s493 = smul.addr %s31, 16
          %s494 = scalar_lea.hbm %s2, %s493
          %s496 = sshll.u32 %s482, 4
          %s497 = int_to_ptr.vmem [resolvable:$true] %s496
          %499 = dma.vmem_to_hbm [thread:$0]  %s497, 16, %s494, %s480
        $region48: #{tpu_custom_call.1} parent=27 // pred_fallthru
          _
        // Predicated region
        $region49: #{tpu_custom_call.1} parent=27 // pred_check
          %p500 = pneg %p139
        $region50: #{tpu_custom_call.1} parent=27 // pred_check_branch
          %502 = sbr.rel (%p500) target = $region52
        $region51: #{tpu_custom_call.1} parent=27 // pred_region
          %s504 = ssub.s32 16, 16
          %505 = vsyncadd %s484, %s504
          %s506 = smul.addr %s31, 16
          %s507 = scalar_lea.hbm %s3, %s506
          %s509 = sshll.u32 %s486, 4
          %s510 = int_to_ptr.vmem [resolvable:$true] %s509
          %512 = dma.vmem_to_hbm [thread:$0]  %s510, 16, %s507, %s484
        $region52: #{tpu_custom_call.1} parent=27 // pred_fallthru
          _
      $region28: #{tpu_custom_call.1} parent=5 // pred_fallthru
        _
      %p513 = scmp.le.s32.totalorder 2, %s22
      // Predicated region
      $region53: #{tpu_custom_call.1} parent=5 // pred_check
        %p514 = pneg %p513
      $region54: #{tpu_custom_call.1} parent=5 // pred_check_branch
        %516 = sbr.rel (%p514) target = $region56
      $region55: #{tpu_custom_call.1} parent=5 // pred_region
        %s517 = ssub.s32 %s22, 2
        // Predicated region
        $region57: #{tpu_custom_call.1} parent=55 // pred_check
          %p518 = pneg %p119
        $region58: #{tpu_custom_call.1} parent=55 // pred_check_branch
          %520 = sbr.rel (%p518) target = $region60
        $region59: #{tpu_custom_call.1} parent=55 // pred_region
          %s521 = sand.u32 %s104, 1
          %s522 = scalar_lea.sflag [#allocation6], %s521
          %s523 = sand.u32 %s104, 1
          %s524 = scalar_lea.vmem [#allocation9], %s523
          %525 = dma.done %s522, 16
        $region60: #{tpu_custom_call.1} parent=55 // pred_fallthru
          _
        // Predicated region
        $region61: #{tpu_custom_call.1} parent=55 // pred_check
          %p526 = pneg %p145
        $region62: #{tpu_custom_call.1} parent=55 // pred_check_branch
          %528 = sbr.rel (%p526) target = $region64
        $region63: #{tpu_custom_call.1} parent=55 // pred_region
          %s529 = sand.u32 %s130, 1
          %s530 = scalar_lea.sflag [#allocation11], %s529
          %s531 = sand.u32 %s130, 1
          %s532 = scalar_lea.vmem [#allocation10], %s531
          %533 = dma.done %s530, 16
        $region64: #{tpu_custom_call.1} parent=55 // pred_fallthru
          _
      $region56: #{tpu_custom_call.1} parent=5 // pred_fallthru
        _
    $region6: #{tpu_custom_call.1} parent=1 // loop_footer
      %s26 = sadd.s32 1, %s22
    $region7: #{tpu_custom_call.1} parent=1 // loop_footer_branch
      %21 = sbr.rel target = $region3
    $region8: #{tpu_custom_call.1} parent=1 // loop_exit
      _
    %534 = vsyncpa [#allocation5], 1
    %s535 = scalar_lea.sflag [#allocation5], 1
    %536 = vsyncpa %s535, 1
    %537 = vsyncpa [#allocation8], 1
    %s538 = scalar_lea.sflag [#allocation8], 1
    %539 = vsyncpa %s538, 1
    %540 = vsyncpa [#allocation6], 1
    %s541 = scalar_lea.sflag [#allocation6], 1
    %542 = vsyncpa %s541, 1
    %543 = vsyncpa [#allocation11], 1
    %s544 = scalar_lea.sflag [#allocation11], 1
    %545 = vsyncpa %s544, 1

</llo_original>
